<compile_context>
chip_gen: v6e
topology: v6e:2x2x1
jax: 0.10.0
libtpu: 0.0.40
codegen_flags: <defaults>
</compile_context>

<pallas_src>
import functools

import jax
import jax.numpy as jnp
from jax.experimental import pallas as pl
from jax.experimental.pallas import tpu as pltpu

NEG_SLOPE = 0.01  # nn.LeakyReLU default negative_slope


def _leaky(x):
    return jnp.where(x >= 0, x, NEG_SLOPE * x)


# ---------------------------------------------------------------------------
# Fused ResLayer kernel: three 1x1 convs + activations + skip, one invocation.
# ---------------------------------------------------------------------------
def res_layer_kernel(skip, bsz,
                     x_ref, w1_ref, b1_ref, w2_ref, b2_ref, w3_ref, b3_ref,
                     o_ref):
    """
    x_ref : (B, C_in, HW)   spatial on lanes (dense), channels on sublanes
    wN    : (outN, inN)     PyTorch conv weight with the 1x1 dims dropped
    bN    : (outN, 1)       broadcasts along the lane (spatial) axis
    o_ref : (B, C_out, HW)
    """
    w1 = w1_ref[...]
    b1 = b1_ref[...]
    w2 = w2_ref[...]
    b2 = b2_ref[...]
    w3 = w3_ref[...]
    b3 = b3_ref[...]
    # Static unroll over batch: B is small, and the unroll lets the LLO
    # scheduler interleave MXU pushes with the LeakyReLU VPU work.
    for b in range(bsz):
        x = x_ref[b]                                            # (C_in, HW)
        o = _leaky(jnp.dot(w1, x, preferred_element_type=jnp.float32) + b1)
        o = _leaky(jnp.dot(w2, o, preferred_element_type=jnp.float32) + b2)
        o = jnp.dot(w3, o, preferred_element_type=jnp.float32) + b3
        if skip:  # static at trace time: inplanes == planes * expansion
            o = o + x
        o_ref[b] = _leaky(o).astype(o_ref.dtype)


# ---------------------------------------------------------------------------
# Wrapper: NCHW <-> (B, C, H*W) are contiguous (layout-free) reshapes.
# ---------------------------------------------------------------------------
def res_layer_forward(x, params, *, expansion=4):
    """x: (B, C_in, H, W) float32, exactly like the PyTorch module."""
    B, C_in, H, W = x.shape
    HW = H * W

    w1 = params['conv1_w'].reshape(params['conv1_w'].shape[0], C_in)
    w2 = params['conv2_w'].reshape(params['conv2_w'].shape[0],
                                   params['conv2_w'].shape[1])
    w3 = params['conv3_w'].reshape(params['conv3_w'].shape[0],
                                   params['conv3_w'].shape[1])
    b1 = params['conv1_b'][:, None]
    b2 = params['conv2_b'][:, None]
    b3 = params['conv3_b'][:, None]

    planes = w1.shape[0]
    C_out = w3.shape[0]
    assert C_out == planes * expansion
    skip = (C_in == C_out)                    # ResLayer.skip (static)

    x3 = x.reshape(B, C_in, HW)

    # Single ungridded call: the whole working set is a few hundred KB, so
    # everything lives in VMEM; no grid / dimension_semantics needed (a grid
    # over this tiny workload would only add per-step overhead).
    vmem = pl.BlockSpec(memory_space=pltpu.MemorySpace.VMEM)
    out3 = pl.pallas_call(
        functools.partial(res_layer_kernel, skip, B),
        out_shape=jax.ShapeDtypeStruct((B, C_out, HW), jnp.float32),
        in_specs=[vmem] * 7,
        out_specs=vmem,
    )(x3, w1, b1, w2, b2, w3, b3)

    return out3.reshape(B, C_out, H, W)


# ---------------------------------------------------------------------------
# Parameter init mirroring conv1x1(): weight ~ N(0, 0.01), bias = 0 in the
# PyTorch module (biases randomized here only to exercise the bias path).
# ---------------------------------------------------------------------------
def init_params(key, inplanes, planes, expansion=4, std=0.01):
    k1, k2, k3, k4, k5, k6 = jax.random.split(key, 6)
    return {
        'conv1_w': std * jax.random.normal(k1, (planes, inplanes, 1, 1), jnp.float32),
        'conv1_b': 0.1 * jax.random.normal(k4, (planes,), jnp.float32),
        'conv2_w': std * jax.random.normal(k2, (planes, planes, 1, 1), jnp.float32),
        'conv2_b': 0.1 * jax.random.normal(k5, (planes,), jnp.float32),
        'conv3_w': std * jax.random.normal(k3, (planes * expansion, planes, 1, 1), jnp.float32),
        'conv3_b': 0.1 * jax.random.normal(k6, (planes * expansion,), jnp.float32),
    }


# Pure-JAX reference of the PyTorch forward (for a correctness check only).
def res_layer_ref(x, params):
    def conv(h, w, b):
        return jnp.einsum('oi,bihw->bohw', w[:, :, 0, 0], h) + b[None, :, None, None]
    out = _leaky(conv(x, params['conv1_w'], params['conv1_b']))
    out = _leaky(conv(out, params['conv2_w'], params['conv2_b']))
    out = conv(out, params['conv3_w'], params['conv3_b'])
    if x.shape[1] == params['conv3_w'].shape[0]:
        out = out + x
    return _leaky(out)


if __name__ == "__main__":
    key = jax.random.PRNGKey(0)
    k_param, k_x = jax.random.split(key)

    # Small shapes consistent with the module: inplanes == planes*expansion
    # so the skip connection is active (the interesting path).
    B, inplanes, planes, expansion = 2, 32, 8, 4
    H = W = 16

    params = init_params(k_param, inplanes, planes, expansion)
    x = jax.random.normal(k_x, (B, inplanes, H, W), jnp.float32)

    out = res_layer_forward(x, params, expansion=expansion)
    jax.block_until_ready(out)

    ref = res_layer_ref(x, params)
    assert out.shape == (B, planes * expansion, H, W)
    max_err = float(jnp.max(jnp.abs(out - ref)))
    assert jnp.allclose(out, ref, atol=1e-3, rtol=1e-2), max_err

    print("KERNEL_OK")
</pallas_src>

<mosaic_0001>
module attributes {stable_mosaic.version = 11 : i64} {
  func.func @res_layer_kernel(%arg0: memref<2x32x256xf32, #tpu.memory_space<vmem>>, %arg1: memref<8x32xf32, #tpu.memory_space<vmem>>, %arg2: memref<8x1xf32, #tpu.memory_space<vmem>>, %arg3: memref<8x8xf32, #tpu.memory_space<vmem>>, %arg4: memref<8x1xf32, #tpu.memory_space<vmem>>, %arg5: memref<32x8xf32, #tpu.memory_space<vmem>>, %arg6: memref<32x1xf32, #tpu.memory_space<vmem>>, %arg7: memref<2x32x256xf32, #tpu.memory_space<vmem>>) attributes {dimension_semantics = [], scalar_prefetch = 0 : i64, scratch_operands = 0 : i64, tpu.core_type = #tpu.core_type<tc>} {
    %c0 = arith.constant 0 : index
    %c0_0 = arith.constant 0 : index
    %0 = vector.load %arg1[%c0, %c0_0] : memref<8x32xf32, #tpu.memory_space<vmem>>, vector<8x32xf32>
    %c0_1 = arith.constant 0 : index
    %c0_2 = arith.constant 0 : index
    %1 = vector.load %arg2[%c0_1, %c0_2] : memref<8x1xf32, #tpu.memory_space<vmem>>, vector<8x1xf32>
    %c0_3 = arith.constant 0 : index
    %c0_4 = arith.constant 0 : index
    %2 = vector.load %arg3[%c0_3, %c0_4] : memref<8x8xf32, #tpu.memory_space<vmem>>, vector<8x8xf32>
    %c0_5 = arith.constant 0 : index
    %c0_6 = arith.constant 0 : index
    %3 = vector.load %arg4[%c0_5, %c0_6] : memref<8x1xf32, #tpu.memory_space<vmem>>, vector<8x1xf32>
    %c0_7 = arith.constant 0 : index
    %c0_8 = arith.constant 0 : index
    %4 = vector.load %arg5[%c0_7, %c0_8] : memref<32x8xf32, #tpu.memory_space<vmem>>, vector<32x8xf32>
    %c0_9 = arith.constant 0 : index
    %c0_10 = arith.constant 0 : index
    %5 = vector.load %arg6[%c0_9, %c0_10] : memref<32x1xf32, #tpu.memory_space<vmem>>, vector<32x1xf32>
    %c0_11 = arith.constant 0 : index
    %c0_12 = arith.constant 0 : index
    %c0_13 = arith.constant 0 : index
    %6 = vector.load %arg0[%c0_11, %c0_12, %c0_13] : memref<2x32x256xf32, #tpu.memory_space<vmem>>, vector<1x32x256xf32>
    %7 = vector.shape_cast %6 : vector<1x32x256xf32> to vector<32x256xf32>
    %cst = arith.constant dense<0.000000e+00> : vector<8x256xf32>
    %8 = tpu.matmul %0, %7, %cst {dimension_numbers = #tpu.dot_dimension_numbers<[1], [0], [0], [1], [0, 0, 1, 1], [], []>} : vector<8x32xf32>, vector<32x256xf32>, vector<8x256xf32> -> vector<8x256xf32>
    %9 = vector.broadcast %1 : vector<8x1xf32> to vector<8x256xf32>
    %10 = arith.addf %8, %9 : vector<8x256xf32>
    %cst_14 = arith.constant 0.000000e+00 : f32
    %11 = vector.broadcast %cst_14 : f32 to vector<8x256xf32>
    %12 = arith.cmpf oge, %10, %11 : vector<8x256xf32>
    %cst_15 = arith.constant 0.00999999977 : f32
    %13 = vector.broadcast %cst_15 : f32 to vector<8x256xf32>
    %14 = arith.mulf %13, %10 : vector<8x256xf32>
    %15 = arith.select %12, %10, %14 : vector<8x256xi1>, vector<8x256xf32>
    %cst_16 = arith.constant dense<0.000000e+00> : vector<8x256xf32>
    %16 = tpu.matmul %2, %15, %cst_16 {dimension_numbers = #tpu.dot_dimension_numbers<[1], [0], [0], [1], [0, 0, 1, 1], [], []>} : vector<8x8xf32>, vector<8x256xf32>, vector<8x256xf32> -> vector<8x256xf32>
    %17 = vector.broadcast %3 : vector<8x1xf32> to vector<8x256xf32>
    %18 = arith.addf %16, %17 : vector<8x256xf32>
    %cst_17 = arith.constant 0.000000e+00 : f32
    %19 = vector.broadcast %cst_17 : f32 to vector<8x256xf32>
    %20 = arith.cmpf oge, %18, %19 : vector<8x256xf32>
    %cst_18 = arith.constant 0.00999999977 : f32
    %21 = vector.broadcast %cst_18 : f32 to vector<8x256xf32>
    %22 = arith.mulf %21, %18 : vector<8x256xf32>
    %23 = arith.select %20, %18, %22 : vector<8x256xi1>, vector<8x256xf32>
    %cst_19 = arith.constant dense<0.000000e+00> : vector<32x256xf32>
    %24 = tpu.matmul %4, %23, %cst_19 {dimension_numbers = #tpu.dot_dimension_numbers<[1], [0], [0], [1], [0, 0, 1, 1], [], []>} : vector<32x8xf32>, vector<8x256xf32>, vector<32x256xf32> -> vector<32x256xf32>
    %25 = vector.broadcast %5 : vector<32x1xf32> to vector<32x256xf32>
    %26 = arith.addf %24, %25 : vector<32x256xf32>
    %27 = arith.addf %26, %7 : vector<32x256xf32>
    %cst_20 = arith.constant 0.000000e+00 : f32
    %28 = vector.broadcast %cst_20 : f32 to vector<32x256xf32>
    %29 = arith.cmpf oge, %27, %28 : vector<32x256xf32>
    %cst_21 = arith.constant 0.00999999977 : f32
    %30 = vector.broadcast %cst_21 : f32 to vector<32x256xf32>
    %31 = arith.mulf %30, %27 : vector<32x256xf32>
    %32 = arith.select %29, %27, %31 : vector<32x256xi1>, vector<32x256xf32>
    %c0_22 = arith.constant 0 : index
    %c0_23 = arith.constant 0 : index
    %c0_24 = arith.constant 0 : index
    %33 = vector.load %arg7[%c0_22, %c0_23, %c0_24] : memref<2x32x256xf32, #tpu.memory_space<vmem>>, vector<1x32x256xf32>
    %34 = vector.shape_cast %33 : vector<1x32x256xf32> to vector<32x256xf32>
    %35 = vector.shape_cast %32 : vector<32x256xf32> to vector<1x32x256xf32>
    tpu.vector_store %arg7[%c0_22, %c0_23, %c0_24], %35 {strides = array<i32>} : memref<2x32x256xf32, #tpu.memory_space<vmem>>, vector<1x32x256xf32>,
    %c1 = arith.constant 1 : index
    %c0_25 = arith.constant 0 : index
    %c0_26 = arith.constant 0 : index
    %36 = vector.load %arg0[%c1, %c0_25, %c0_26] : memref<2x32x256xf32, #tpu.memory_space<vmem>>, vector<1x32x256xf32>
    %37 = vector.shape_cast %36 : vector<1x32x256xf32> to vector<32x256xf32>
    %cst_27 = arith.constant dense<0.000000e+00> : vector<8x256xf32>
    %38 = tpu.matmul %0, %37, %cst_27 {dimension_numbers = #tpu.dot_dimension_numbers<[1], [0], [0], [1], [0, 0, 1, 1], [], []>} : vector<8x32xf32>, vector<32x256xf32>, vector<8x256xf32> -> vector<8x256xf32>
    %39 = vector.broadcast %1 : vector<8x1xf32> to vector<8x256xf32>
    %40 = arith.addf %38, %39 : vector<8x256xf32>
    %cst_28 = arith.constant 0.000000e+00 : f32
    %41 = vector.broadcast %cst_28 : f32 to vector<8x256xf32>
    %42 = arith.cmpf oge, %40, %41 : vector<8x256xf32>
    %cst_29 = arith.constant 0.00999999977 : f32
    %43 = vector.broadcast %cst_29 : f32 to vector<8x256xf32>
    %44 = arith.mulf %43, %40 : vector<8x256xf32>
    %45 = arith.select %42, %40, %44 : vector<8x256xi1>, vector<8x256xf32>
    %cst_30 = arith.constant dense<0.000000e+00> : vector<8x256xf32>
    %46 = tpu.matmul %2, %45, %cst_30 {dimension_numbers = #tpu.dot_dimension_numbers<[1], [0], [0], [1], [0, 0, 1, 1], [], []>} : vector<8x8xf32>, vector<8x256xf32>, vector<8x256xf32> -> vector<8x256xf32>
    %47 = vector.broadcast %3 : vector<8x1xf32> to vector<8x256xf32>
    %48 = arith.addf %46, %47 : vector<8x256xf32>
    %cst_31 = arith.constant 0.000000e+00 : f32
    %49 = vector.broadcast %cst_31 : f32 to vector<8x256xf32>
    %50 = arith.cmpf oge, %48, %49 : vector<8x256xf32>
    %cst_32 = arith.constant 0.00999999977 : f32
    %51 = vector.broadcast %cst_32 : f32 to vector<8x256xf32>
    %52 = arith.mulf %51, %48 : vector<8x256xf32>
    %53 = arith.select %50, %48, %52 : vector<8x256xi1>, vector<8x256xf32>
    %cst_33 = arith.constant dense<0.000000e+00> : vector<32x256xf32>
    %54 = tpu.matmul %4, %53, %cst_33 {dimension_numbers = #tpu.dot_dimension_numbers<[1], [0], [0], [1], [0, 0, 1, 1], [], []>} : vector<32x8xf32>, vector<8x256xf32>, vector<32x256xf32> -> vector<32x256xf32>
    %55 = vector.broadcast %5 : vector<32x1xf32> to vector<32x256xf32>
    %56 = arith.addf %54, %55 : vector<32x256xf32>
    %57 = arith.addf %56, %37 : vector<32x256xf32>
    %cst_34 = arith.constant 0.000000e+00 : f32
    %58 = vector.broadcast %cst_34 : f32 to vector<32x256xf32>
    %59 = arith.cmpf oge, %57, %58 : vector<32x256xf32>
    %cst_35 = arith.constant 0.00999999977 : f32
    %60 = vector.broadcast %cst_35 : f32 to vector<32x256xf32>
    %61 = arith.mulf %60, %57 : vector<32x256xf32>
    %62 = arith.select %59, %57, %61 : vector<32x256xi1>, vector<32x256xf32>
    %c1_36 = arith.constant 1 : index
    %c0_37 = arith.constant 0 : index
    %c0_38 = arith.constant 0 : index
    %63 = vector.load %arg7[%c1_36, %c0_37, %c0_38] : memref<2x32x256xf32, #tpu.memory_space<vmem>>, vector<1x32x256xf32>
    %64 = vector.shape_cast %63 : vector<1x32x256xf32> to vector<32x256xf32>
    %65 = vector.shape_cast %62 : vector<32x256xf32> to vector<1x32x256xf32>
    tpu.vector_store %arg7[%c1_36, %c0_37, %c0_38], %65 {strides = array<i32>} : memref<2x32x256xf32, #tpu.memory_space<vmem>>, vector<1x32x256xf32>,
    return
  }
}

</mosaic_0001>

<llo_original>
// kernel: tpu_custom_call.1
$region0: #{tpu_custom_call.1}
  #allocation0 [shape = 'u32[]', space=smem, size = 0x4, offset = 0x4, fixed_abs, tag = 'smem constant byte address 0x4 - core index']
  #allocation1 [shape = 'u32[144,128]{1,0:T(1,128)}', space=vmem, size = 0x12000, scoped, tag = 'internal scratch']
  %s0 = inlined_call_operand.hbm [shape: f32[2,32,256], index: 0, kind: input, shape index: {}]
  %s1 = inlined_call_operand.vmem [shape: f32[8,32], index: 1, kind: input, shape index: {}]
  %s2 = inlined_call_operand.vmem [shape: f32[8,1], index: 2, kind: input, shape index: {}]
  %s3 = inlined_call_operand.vmem [shape: f32[8,8], index: 3, kind: input, shape index: {}]
  %s4 = inlined_call_operand.vmem [shape: f32[8,1], index: 4, kind: input, shape index: {}]
  %s5 = inlined_call_operand.vmem [shape: f32[32,8], index: 5, kind: input, shape index: {}]
  %s6 = inlined_call_operand.vmem [shape: f32[32,1], index: 6, kind: input, shape index: {}]
  %s7 = inlined_call_operand.hbm [shape: f32[2,32,256], index: 7, kind: output, shape index: {}]
  %s8 = sld [smem:[#allocation0]]
  $region42: #{tpu_custom_call.1} parent=0
    _
  %s10 = ssub.s32 1, %s8
  %s11 = scalar_select 0, %s10, %s8
  $region1: #{tpu_custom_call.1} parent=0
    #allocation2 [shape = 'u8[65536]{0}', space=vmem, size = 0x10000, scoped, tag = 'input window, operand 0, single buffered']
    #allocation3 [shape = 's32[1]{0}', space=sflag, size = 0x4, scoped, tag = 'scoped memory for tpu_custom_call.1']
    #allocation4 [shape = 's32[1]{0}', space=sflag, size = 0x4, scoped, tag = 'scoped memory for tpu_custom_call.1']
    #allocation5 [shape = 'u8[65536]{0}', space=vmem, size = 0x10000, scoped, tag = 'output window, operand 0, single buffered']
    %12 = vsyncpa [#allocation3], 0
    %13 = vsyncpa [#allocation4], 0
    // Predicated region
    $region2: #{tpu_custom_call.1} parent=1 // pred_check
      _
    $region3: #{tpu_custom_call.1} parent=1 // pred_check_branch
      %15 = sbr.rel (0) target = $region5
    $region4: #{tpu_custom_call.1} parent=1 // pred_region
      %s17 = ssub.s32 2048, 2048
      %18 = vsyncadd [#allocation3], %s17
      %s19 = sshll.u32 [#allocation2], 4
      %s20 = int_to_ptr.vmem [resolvable:$true] %s19
      %25 = dma.hbm_to_vmem [thread:$0]  %s0, 2048, %s20, [#allocation3], 256, 256, 16
    $region5: #{tpu_custom_call.1} parent=1 // pred_fallthru
      _
    // Predicated region
    $region6: #{tpu_custom_call.1} parent=1 // pred_check
      _
    $region7: #{tpu_custom_call.1} parent=1 // pred_check_branch
      %27 = sbr.rel (0) target = $region9
    $region8: #{tpu_custom_call.1} parent=1 // pred_region
      _
    $region9: #{tpu_custom_call.1} parent=1 // pred_fallthru
      _
    // Predicated region
    $region10: #{tpu_custom_call.1} parent=1 // pred_check
      _
    $region11: #{tpu_custom_call.1} parent=1 // pred_check_branch
      %29 = sbr.rel (0) target = $region13
    $region12: #{tpu_custom_call.1} parent=1 // pred_region
      _
    $region13: #{tpu_custom_call.1} parent=1 // pred_fallthru
      _
    // Predicated region
    $region14: #{tpu_custom_call.1} parent=1 // pred_check
      _
    $region15: #{tpu_custom_call.1} parent=1 // pred_check_branch
      %31 = sbr.rel (0) target = $region17
    $region16: #{tpu_custom_call.1} parent=1 // pred_region
      _
    $region17: #{tpu_custom_call.1} parent=1 // pred_fallthru
      _
    // Predicated region
    $region18: #{tpu_custom_call.1} parent=1 // pred_check
      _
    $region19: #{tpu_custom_call.1} parent=1 // pred_check_branch
      %33 = sbr.rel (0) target = $region21
    $region20: #{tpu_custom_call.1} parent=1 // pred_region
      _
    $region21: #{tpu_custom_call.1} parent=1 // pred_fallthru
      _
    // Predicated region
    $region22: #{tpu_custom_call.1} parent=1 // pred_check
      _
    $region23: #{tpu_custom_call.1} parent=1 // pred_check_branch
      %35 = sbr.rel (0) target = $region25
    $region24: #{tpu_custom_call.1} parent=1 // pred_region
      _
    $region25: #{tpu_custom_call.1} parent=1 // pred_fallthru
      _
    // Predicated region
    $region26: #{tpu_custom_call.1} parent=1 // pred_check
      _
    $region27: #{tpu_custom_call.1} parent=1 // pred_check_branch
      %37 = sbr.rel (0) target = $region29
    $region28: #{tpu_custom_call.1} parent=1 // pred_region
      _
    $region29: #{tpu_custom_call.1} parent=1 // pred_fallthru
      _
    // Predicated region
    $region30: #{tpu_custom_call.1} parent=1 // pred_check
      _
    $region31: #{tpu_custom_call.1} parent=1 // pred_check_branch
      %39 = sbr.rel (0) target = $region33
    $region32: #{tpu_custom_call.1} parent=1 // pred_region
      %40 = dma.done [#allocation3], 2048
    $region33: #{tpu_custom_call.1} parent=1 // pred_fallthru
      _
    %v41 = vld [vmem:[%s1] sm:$0xff]
    %v42 = vld [vmem:[%s2] sm:$0xff]
    %v43 = vld [vmem:[%s3] sm:$0xff]
    %v44 = vld [vmem:[%s4] sm:$0xff]
    %v45 = vld [vmem:[%s5] sm:$0xff]
    %v46 = vld [vmem:[%s5 + $0x8] sm:$0xff]
    %v47 = vld [vmem:[%s5 + $0x10] sm:$0xff]
    %v48 = vld [vmem:[%s5 + $0x18] sm:$0xff]
    %v49 = vld [vmem:[%s6] sm:$0xff]
    %v50 = vld [vmem:[%s6 + $0x8] sm:$0xff]
    %v51 = vld [vmem:[%s6 + $0x10] sm:$0xff]
    %v52 = vld [vmem:[%s6 + $0x18] sm:$0xff]
    %v53 = vld [vmem:[#allocation2] sm:$0xff]
    %v54 = vld [vmem:[#allocation2 + $0x8] sm:$0xff]
    %v55 = vld [vmem:[#allocation2 + $0x10] sm:$0xff]
    %v56 = vld [vmem:[#allocation2 + $0x18] sm:$0xff]
    %v57 = vld [vmem:[#allocation2 + $0x20] sm:$0xff]
    %v58 = vld [vmem:[#allocation2 + $0x28] sm:$0xff]
    %v59 = vld [vmem:[#allocation2 + $0x30] sm:$0xff]
    %v60 = vld [vmem:[#allocation2 + $0x38] sm:$0xff]
    %62 = vset.pattern.permute.xlu0 0
    %63 = vperm.xlu0 %62, %v42
    %v64 = vpop.permute.xlu0 %63
    %vm66 = vcmask 261120
    %v68 = vsel %vm66, %v41, 0
    %70 = vmatprep.subr.mxu0 0.0
    %71 = vmatpush1.msra.mxu0 0.0
    %72 = vmatprep.subr.mxu0 0.0
    %73 = vmatpush1.msra.mxu0 0.0
    %74 = vmatprep.subr.mxu0 0.0
    %75 = vmatpush1.msra.mxu0 0.0
    %76 = vmatprep.subr.mxu0 0.0
    %77 = vmatpush1.msra.mxu0 0.0
    %78 = vmatprep.subr.mxu0 0.0
    %79 = vmatpush1.msra.mxu0 0.0
    %80 = vmatprep.subr.mxu0 0.0
    %81 = vmatpush1.msra.mxu0 0.0
    %82 = vmatprep.subr.mxu0 0.0
    %83 = vmatpush1.msra.mxu0 0.0
    %84 = vmatprep.subr.mxu0 0.0
    %85 = vmatpush1.msra.mxu0 0.0
    %86 = vmatprep.subr.mxu0 0.0
    %87 = vmatpush1.msra.mxu0 0.0
    %88 = vmatprep.subr.mxu0 0.0
    %89 = vmatpush1.msra.mxu0 0.0
    %90 = vmatprep.subr.mxu0 0.0
    %91 = vmatpush1.msra.mxu0 0.0
    %92 = vmatprep.subr.mxu0 0.0
    %93 = vmatpush1.msra.mxu0 0.0
    %94 = vmatprep.subr.mxu0 %v60
    %95 = vmatpush1.msra.mxu0 %v59
    %96 = vmatprep.subr.mxu0 %v58
    %97 = vmatpush1.msra.mxu0 %v57
    %98 = vmatprep.subr.mxu0 %v56
    %99 = vmatpush1.msra.mxu0 %v55
    %100 = vmatprep.subr.mxu0 %v54
    %101 = vmatpush1.msra.mxu0 %v53
    %102 = vmatprep.subr.mxu0 0.0
    %103 = vmatpush2.msra.mxu0 0.0
    %104 = vmatprep.subr.mxu0 0.0
    %105 = vmatpush2.msra.mxu0 0.0
    %106 = vmatprep.subr.mxu0 0.0
    %107 = vmatpush2.msra.mxu0 0.0
    %108 = vmatprep.subr.mxu0 0.0
    %109 = vmatpush2.msra.mxu0 0.0
    %110 = vmatprep.subr.mxu0 0.0
    %111 = vmatpush2.msra.mxu0 0.0
    %112 = vmatprep.subr.mxu0 0.0
    %113 = vmatpush2.msra.mxu0 0.0
    %114 = vmatprep.subr.mxu0 0.0
    %115 = vmatpush2.msra.mxu0 0.0
    %116 = vmatprep.subr.mxu0 0.0
    %117 = vmatpush2.msra.mxu0 0.0
    %118 = vmatprep.subr.mxu0 0.0
    %119 = vmatpush2.msra.mxu0 0.0
    %120 = vmatprep.subr.mxu0 0.0
    %121 = vmatpush2.msra.mxu0 0.0
    %122 = vmatprep.subr.mxu0 0.0
    %123 = vmatpush2.msra.mxu0 0.0
    %124 = vmatprep.subr.mxu0 0.0
    %125 = vmatpush2.msra.mxu0 0.0
    %126 = vmatprep.subr.mxu0 0.0
    %127 = vmatpush2.msra.mxu0 0.0
    %128 = vmatprep.subr.mxu0 0.0
    %129 = vmatpush2.msra.mxu0 0.0
    %130 = vmatprep.subr.mxu0 0.0
    %131 = vmatpush2.msra.mxu0 0.0
    %132 = vmatprep.subr.mxu0 0.0
    %133 = vmatpush2.msra.mxu0 0.0
    %134 = vmatprep.mubr.f32.mxu0 0.0
    %135 = vmatmul.mubr.f32.gmra.mxu0 %v68
    %v136 = vpop.f32.mrf.mxu0
    %v137 = vadd.f32 %v64, %v136
    %v138 = vpop.f32.mrf.mxu0
    %v139 = vadd.f32 %v64, %v138
    %140 = vdwg.mxu0
    %vm141 = vcmp.ge.f32.partialorder %v137, 0.0
    %vm142 = vcmp.ge.f32.partialorder %v139, 0.0
    %v143 = vmul.f32 %v137, 0.01
    %v144 = vmul.f32 %v139, 0.01
    %v145 = vsel %vm141, %v137, %v143
    %v146 = vsel %vm142, %v139, %v144
    %148 = vset.pattern.permute.xlu0 0
    %149 = vperm.xlu0 %148, %v44
    %v150 = vpop.permute.xlu0 %149
    %vm152 = vcmask 64512
    %v154 = vsel %vm152, %v43, 0
    %156 = vmatprep.subr.mxu0 0.0
    %157 = vmatpush1.msra.mxu0 0.0
    %158 = vmatprep.subr.mxu0 0.0
    %159 = vmatpush1.msra.mxu0 0.0
    %160 = vmatprep.subr.mxu0 0.0
    %161 = vmatpush1.msra.mxu0 0.0
    %162 = vmatprep.subr.mxu0 0.0
    %163 = vmatpush1.msra.mxu0 0.0
    %164 = vmatprep.subr.mxu0 0.0
    %165 = vmatpush1.msra.mxu0 0.0
    %166 = vmatprep.subr.mxu0 0.0
    %167 = vmatpush1.msra.mxu0 0.0
    %168 = vmatprep.subr.mxu0 0.0
    %169 = vmatpush1.msra.mxu0 0.0
    %170 = vmatprep.subr.mxu0 0.0
    %171 = vmatpush1.msra.mxu0 0.0
    %172 = vmatprep.subr.mxu0 0.0
    %173 = vmatpush1.msra.mxu0 0.0
    %174 = vmatprep.subr.mxu0 0.0
    %175 = vmatpush1.msra.mxu0 0.0
    %176 = vmatprep.subr.mxu0 0.0
    %177 = vmatpush1.msra.mxu0 0.0
    %178 = vmatprep.subr.mxu0 0.0
    %179 = vmatpush1.msra.mxu0 0.0
    %180 = vmatprep.subr.mxu0 0.0
    %181 = vmatpush1.msra.mxu0 0.0
    %182 = vmatprep.subr.mxu0 0.0
    %183 = vmatpush1.msra.mxu0 0.0
    %184 = vmatprep.subr.mxu0 0.0
    %185 = vmatpush1.msra.mxu0 0.0
    %186 = vmatprep.subr.mxu0 %v146
    %187 = vmatpush1.msra.mxu0 %v145
    %188 = vmatprep.subr.mxu0 0.0
    %189 = vmatpush2.msra.mxu0 0.0
    %190 = vmatprep.subr.mxu0 0.0
    %191 = vmatpush2.msra.mxu0 0.0
    %192 = vmatprep.subr.mxu0 0.0
    %193 = vmatpush2.msra.mxu0 0.0
    %194 = vmatprep.subr.mxu0 0.0
    %195 = vmatpush2.msra.mxu0 0.0
    %196 = vmatprep.subr.mxu0 0.0
    %197 = vmatpush2.msra.mxu0 0.0
    %198 = vmatprep.subr.mxu0 0.0
    %199 = vmatpush2.msra.mxu0 0.0
    %200 = vmatprep.subr.mxu0 0.0
    %201 = vmatpush2.msra.mxu0 0.0
    %202 = vmatprep.subr.mxu0 0.0
    %203 = vmatpush2.msra.mxu0 0.0
    %204 = vmatprep.subr.mxu0 0.0
    %205 = vmatpush2.msra.mxu0 0.0
    %206 = vmatprep.subr.mxu0 0.0
    %207 = vmatpush2.msra.mxu0 0.0
    %208 = vmatprep.subr.mxu0 0.0
    %209 = vmatpush2.msra.mxu0 0.0
    %210 = vmatprep.subr.mxu0 0.0
    %211 = vmatpush2.msra.mxu0 0.0
    %212 = vmatprep.subr.mxu0 0.0
    %213 = vmatpush2.msra.mxu0 0.0
    %214 = vmatprep.subr.mxu0 0.0
    %215 = vmatpush2.msra.mxu0 0.0
    %216 = vmatprep.subr.mxu0 0.0
    %217 = vmatpush2.msra.mxu0 0.0
    %218 = vmatprep.subr.mxu0 0.0
    %219 = vmatpush2.msra.mxu0 0.0
    %220 = vmatprep.mubr.f32.mxu0 0.0
    %221 = vmatmul.mubr.f32.gmra.mxu0 %v154
    %v222 = vpop.f32.mrf.mxu0
    %v223 = vadd.f32 %v150, %v222
    %v224 = vpop.f32.mrf.mxu0
    %v225 = vadd.f32 %v150, %v224
    %226 = vdwg.mxu0
    %vm227 = vcmp.ge.f32.partialorder %v223, 0.0
    %vm228 = vcmp.ge.f32.partialorder %v225, 0.0
    %v229 = vmul.f32 %v223, 0.01
    %v230 = vmul.f32 %v225, 0.01
    %v231 = vsel %vm227, %v223, %v229
    %v232 = vsel %vm228, %v225, %v230
    %234 = vset.pattern.permute.xlu0 0
    %235 = vperm.xlu0 %234, %v49
    %v236 = vpop.permute.xlu0 %235
    %239 = vset.pattern.permute.xlu0 0
    %240 = vperm.xlu0 %239, %v50
    %v241 = vpop.permute.xlu0 %240
    %244 = vset.pattern.permute.xlu0 0
    %245 = vperm.xlu0 %244, %v51
    %v246 = vpop.permute.xlu0 %245
    %249 = vset.pattern.permute.xlu0 0
    %250 = vperm.xlu0 %249, %v52
    %v251 = vpop.permute.xlu0 %250
    %v254 = vsel %vm152, %v45, 0
    %v257 = vsel %vm152, %v46, 0
    %v260 = vsel %vm152, %v47, 0
    %v263 = vsel %vm152, %v48, 0
    %265 = vmatprep.subr.mxu0 0.0
    %266 = vmatpush1.msra.mxu0 0.0
    %267 = vmatprep.subr.mxu0 0.0
    %268 = vmatpush1.msra.mxu0 0.0
    %269 = vmatprep.subr.mxu0 0.0
    %270 = vmatpush1.msra.mxu0 0.0
    %271 = vmatprep.subr.mxu0 0.0
    %272 = vmatpush1.msra.mxu0 0.0
    %273 = vmatprep.subr.mxu0 0.0
    %274 = vmatpush1.msra.mxu0 0.0
    %275 = vmatprep.subr.mxu0 0.0
    %276 = vmatpush1.msra.mxu0 0.0
    %277 = vmatprep.subr.mxu0 0.0
    %278 = vmatpush1.msra.mxu0 0.0
    %279 = vmatprep.subr.mxu0 0.0
    %280 = vmatpush1.msra.mxu0 0.0
    %281 = vmatprep.subr.mxu0 0.0
    %282 = vmatpush1.msra.mxu0 0.0
    %283 = vmatprep.subr.mxu0 0.0
    %284 = vmatpush1.msra.mxu0 0.0
    %285 = vmatprep.subr.mxu0 0.0
    %286 = vmatpush1.msra.mxu0 0.0
    %287 = vmatprep.subr.mxu0 0.0
    %288 = vmatpush1.msra.mxu0 0.0
    %289 = vmatprep.subr.mxu0 0.0
    %290 = vmatpush1.msra.mxu0 0.0
    %291 = vmatprep.subr.mxu0 0.0
    %292 = vmatpush1.msra.mxu0 0.0
    %293 = vmatprep.subr.mxu0 0.0
    %294 = vmatpush1.msra.mxu0 0.0
    %295 = vmatprep.subr.mxu0 %v232
    %296 = vmatpush1.msra.mxu0 %v231
    %297 = vmatprep.subr.mxu0 0.0
    %298 = vmatpush2.msra.mxu0 0.0
    %299 = vmatprep.subr.mxu0 0.0
    %300 = vmatpush2.msra.mxu0 0.0
    %301 = vmatprep.subr.mxu0 0.0
    %302 = vmatpush2.msra.mxu0 0.0
    %303 = vmatprep.subr.mxu0 0.0
    %304 = vmatpush2.msra.mxu0 0.0
    %305 = vmatprep.subr.mxu0 0.0
    %306 = vmatpush2.msra.mxu0 0.0
    %307 = vmatprep.subr.mxu0 0.0
    %308 = vmatpush2.msra.mxu0 0.0
    %309 = vmatprep.subr.mxu0 0.0
    %310 = vmatpush2.msra.mxu0 0.0
    %311 = vmatprep.subr.mxu0 0.0
    %312 = vmatpush2.msra.mxu0 0.0
    %313 = vmatprep.subr.mxu0 0.0
    %314 = vmatpush2.msra.mxu0 0.0
    %315 = vmatprep.subr.mxu0 0.0
    %316 = vmatpush2.msra.mxu0 0.0
    %317 = vmatprep.subr.mxu0 0.0
    %318 = vmatpush2.msra.mxu0 0.0
    %319 = vmatprep.subr.mxu0 0.0
    %320 = vmatpush2.msra.mxu0 0.0
    %321 = vmatprep.subr.mxu0 0.0
    %322 = vmatpush2.msra.mxu0 0.0
    %323 = vmatprep.subr.mxu0 0.0
    %324 = vmatpush2.msra.mxu0 0.0
    %325 = vmatprep.subr.mxu0 0.0
    %326 = vmatpush2.msra.mxu0 0.0
    %327 = vmatprep.subr.mxu0 0.0
    %328 = vmatpush2.msra.mxu0 0.0
    %329 = vmatprep.mubr.f32.mxu0 0.0
    %330 = vmatmul.mubr.f32.gmra.mxu0 %v254
    %v331 = vpop.f32.mrf.mxu0
    %v332 = vadd.f32 %v236, %v331
    %v333 = vpop.f32.mrf.mxu0
    %v334 = vadd.f32 %v236, %v333
    %335 = vmatprep.mubr.f32.mxu0 0.0
    %336 = vmatmul.mubr.f32.gmra.mxu0 %v257
    %v337 = vpop.f32.mrf.mxu0
    %v338 = vadd.f32 %v241, %v337
    %v339 = vpop.f32.mrf.mxu0
    %v340 = vadd.f32 %v241, %v339
    %341 = vmatprep.mubr.f32.mxu0 0.0
    %342 = vmatmul.mubr.f32.gmra.mxu0 %v260
    %v343 = vpop.f32.mrf.mxu0
    %v344 = vadd.f32 %v246, %v343
    %v345 = vpop.f32.mrf.mxu0
    %v346 = vadd.f32 %v246, %v345
    %347 = vmatprep.mubr.f32.mxu0 0.0
    %348 = vmatmul.mubr.f32.gmra.mxu0 %v263
    %v349 = vpop.f32.mrf.mxu0
    %v350 = vadd.f32 %v251, %v349
    %v351 = vpop.f32.mrf.mxu0
    %v352 = vadd.f32 %v251, %v351
    %353 = vdwg.mxu0
    %v354 = vadd.f32 %v332, %v53
    %v355 = vadd.f32 %v334, %v54
    %v356 = vadd.f32 %v338, %v55
    %v357 = vadd.f32 %v340, %v56
    %v358 = vadd.f32 %v344, %v57
    %v359 = vadd.f32 %v346, %v58
    %v360 = vadd.f32 %v350, %v59
    %v361 = vadd.f32 %v352, %v60
    %vm362 = vcmp.ge.f32.partialorder %v354, 0.0
    %vm363 = vcmp.ge.f32.partialorder %v355, 0.0
    %vm364 = vcmp.ge.f32.partialorder %v356, 0.0
    %vm365 = vcmp.ge.f32.partialorder %v357, 0.0
    %vm366 = vcmp.ge.f32.partialorder %v358, 0.0
    %vm367 = vcmp.ge.f32.partialorder %v359, 0.0
    %vm368 = vcmp.ge.f32.partialorder %v360, 0.0
    %vm369 = vcmp.ge.f32.partialorder %v361, 0.0
    %v370 = vmul.f32 %v354, 0.01
    %v371 = vmul.f32 %v355, 0.01
    %v372 = vmul.f32 %v356, 0.01
    %v373 = vmul.f32 %v357, 0.01
    %v374 = vmul.f32 %v358, 0.01
    %v375 = vmul.f32 %v359, 0.01
    %v376 = vmul.f32 %v360, 0.01
    %v377 = vmul.f32 %v361, 0.01
    %v378 = vsel %vm362, %v354, %v370
    %v379 = vsel %vm363, %v355, %v371
    %v380 = vsel %vm364, %v356, %v372
    %v381 = vsel %vm365, %v357, %v373
    %v382 = vsel %vm366, %v358, %v374
    %v383 = vsel %vm367, %v359, %v375
    %v384 = vsel %vm368, %v360, %v376
    %v385 = vsel %vm369, %v361, %v377
    %386 = vst [vmem:[#allocation5] sm:$0xff] %v378
    %387 = vst [vmem:[#allocation5 + $0x8] sm:$0xff] %v379
    %388 = vst [vmem:[#allocation5 + $0x10] sm:$0xff] %v380
    %389 = vst [vmem:[#allocation5 + $0x18] sm:$0xff] %v381
    %390 = vst [vmem:[#allocation5 + $0x20] sm:$0xff] %v382
    %391 = vst [vmem:[#allocation5 + $0x28] sm:$0xff] %v383
    %392 = vst [vmem:[#allocation5 + $0x30] sm:$0xff] %v384
    %393 = vst [vmem:[#allocation5 + $0x38] sm:$0xff] %v385
    %s394 = scalar_lea.vmem [#allocation2], 64
    %v395 = vld [vmem:[%s394] sm:$0xff]
    %v396 = vld [vmem:[%s394 + $0x8] sm:$0xff]
    %v397 = vld [vmem:[%s394 + $0x10] sm:$0xff]
    %v398 = vld [vmem:[%s394 + $0x18] sm:$0xff]
    %v399 = vld [vmem:[%s394 + $0x20] sm:$0xff]
    %v400 = vld [vmem:[%s394 + $0x28] sm:$0xff]
    %v401 = vld [vmem:[%s394 + $0x30] sm:$0xff]
    %v402 = vld [vmem:[%s394 + $0x38] sm:$0xff]
    %403 = vmatprep.subr.mxu0 0.0
    %404 = vmatpush1.msra.mxu0 0.0
    %405 = vmatprep.subr.mxu0 0.0
    %406 = vmatpush1.msra.mxu0 0.0
    %407 = vmatprep.subr.mxu0 0.0
    %408 = vmatpush1.msra.mxu0 0.0
    %409 = vmatprep.subr.mxu0 0.0
    %410 = vmatpush1.msra.mxu0 0.0
    %411 = vmatprep.subr.mxu0 0.0
    %412 = vmatpush1.msra.mxu0 0.0
    %413 = vmatprep.subr.mxu0 0.0
    %414 = vmatpush1.msra.mxu0 0.0
    %415 = vmatprep.subr.mxu0 0.0
    %416 = vmatpush1.msra.mxu0 0.0
    %417 = vmatprep.subr.mxu0 0.0
    %418 = vmatpush1.msra.mxu0 0.0
    %419 = vmatprep.subr.mxu0 0.0
    %420 = vmatpush1.msra.mxu0 0.0
    %421 = vmatprep.subr.mxu0 0.0
    %422 = vmatpush1.msra.mxu0 0.0
    %423 = vmatprep.subr.mxu0 0.0
    %424 = vmatpush1.msra.mxu0 0.0
    %425 = vmatprep.subr.mxu0 0.0
    %426 = vmatpush1.msra.mxu0 0.0
    %427 = vmatprep.subr.mxu0 %v402
    %428 = vmatpush1.msra.mxu0 %v401
    %429 = vmatprep.subr.mxu0 %v400
    %430 = vmatpush1.msra.mxu0 %v399
    %431 = vmatprep.subr.mxu0 %v398
    %432 = vmatpush1.msra.mxu0 %v397
    %433 = vmatprep.subr.mxu0 %v396
    %434 = vmatpush1.msra.mxu0 %v395
    %435 = vmatprep.subr.mxu0 0.0
    %436 = vmatpush2.msra.mxu0 0.0
    %437 = vmatprep.subr.mxu0 0.0
    %438 = vmatpush2.msra.mxu0 0.0
    %439 = vmatprep.subr.mxu0 0.0
    %440 = vmatpush2.msra.mxu0 0.0
    %441 = vmatprep.subr.mxu0 0.0
    %442 = vmatpush2.msra.mxu0 0.0
    %443 = vmatprep.subr.mxu0 0.0
    %444 = vmatpush2.msra.mxu0 0.0
    %445 = vmatprep.subr.mxu0 0.0
    %446 = vmatpush2.msra.mxu0 0.0
    %447 = vmatprep.subr.mxu0 0.0
    %448 = vmatpush2.msra.mxu0 0.0
    %449 = vmatprep.subr.mxu0 0.0
    %450 = vmatpush2.msra.mxu0 0.0
    %451 = vmatprep.subr.mxu0 0.0
    %452 = vmatpush2.msra.mxu0 0.0
    %453 = vmatprep.subr.mxu0 0.0
    %454 = vmatpush2.msra.mxu0 0.0
    %455 = vmatprep.subr.mxu0 0.0
    %456 = vmatpush2.msra.mxu0 0.0
    %457 = vmatprep.subr.mxu0 0.0
    %458 = vmatpush2.msra.mxu0 0.0
    %459 = vmatprep.subr.mxu0 0.0
    %460 = vmatpush2.msra.mxu0 0.0
    %461 = vmatprep.subr.mxu0 0.0
    %462 = vmatpush2.msra.mxu0 0.0
    %463 = vmatprep.subr.mxu0 0.0
    %464 = vmatpush2.msra.mxu0 0.0
    %465 = vmatprep.subr.mxu0 0.0
    %466 = vmatpush2.msra.mxu0 0.0
    %467 = vmatprep.mubr.f32.mxu0 0.0
    %468 = vmatmul.mubr.f32.gmra.mxu0 %v68
    %v469 = vpop.f32.mrf.mxu0
    %v470 = vadd.f32 %v64, %v469
    %v471 = vpop.f32.mrf.mxu0
    %v472 = vadd.f32 %v64, %v471
    %473 = vdwg.mxu0
    %vm474 = vcmp.ge.f32.partialorder %v470, 0.0
    %vm475 = vcmp.ge.f32.partialorder %v472, 0.0
    %v476 = vmul.f32 %v470, 0.01
    %v477 = vmul.f32 %v472, 0.01
    %v478 = vsel %vm474, %v470, %v476
    %v479 = vsel %vm475, %v472, %v477
    %480 = vmatprep.subr.mxu0 0.0
    %481 = vmatpush1.msra.mxu0 0.0
    %482 = vmatprep.subr.mxu0 0.0
    %483 = vmatpush1.msra.mxu0 0.0
    %484 = vmatprep.subr.mxu0 0.0
    %485 = vmatpush1.msra.mxu0 0.0
    %486 = vmatprep.subr.mxu0 0.0
    %487 = vmatpush1.msra.mxu0 0.0
    %488 = vmatprep.subr.mxu0 0.0
    %489 = vmatpush1.msra.mxu0 0.0
    %490 = vmatprep.subr.mxu0 0.0
    %491 = vmatpush1.msra.mxu0 0.0
    %492 = vmatprep.subr.mxu0 0.0
    %493 = vmatpush1.msra.mxu0 0.0
    %494 = vmatprep.subr.mxu0 0.0
    %495 = vmatpush1.msra.mxu0 0.0
    %496 = vmatprep.subr.mxu0 0.0
    %497 = vmatpush1.msra.mxu0 0.0
    %498 = vmatprep.subr.mxu0 0.0
    %499 = vmatpush1.msra.mxu0 0.0
    %500 = vmatprep.subr.mxu0 0.0
    %501 = vmatpush1.msra.mxu0 0.0
    %502 = vmatprep.subr.mxu0 0.0
    %503 = vmatpush1.msra.mxu0 0.0
    %504 = vmatprep.subr.mxu0 0.0
    %505 = vmatpush1.msra.mxu0 0.0
    %506 = vmatprep.subr.mxu0 0.0
    %507 = vmatpush1.msra.mxu0 0.0
    %508 = vmatprep.subr.mxu0 0.0
    %509 = vmatpush1.msra.mxu0 0.0
    %510 = vmatprep.subr.mxu0 %v479
    %511 = vmatpush1.msra.mxu0 %v478
    %512 = vmatprep.subr.mxu0 0.0
    %513 = vmatpush2.msra.mxu0 0.0
    %514 = vmatprep.subr.mxu0 0.0
    %515 = vmatpush2.msra.mxu0 0.0
    %516 = vmatprep.subr.mxu0 0.0
    %517 = vmatpush2.msra.mxu0 0.0
    %518 = vmatprep.subr.mxu0 0.0
    %519 = vmatpush2.msra.mxu0 0.0
    %520 = vmatprep.subr.mxu0 0.0
    %521 = vmatpush2.msra.mxu0 0.0
    %522 = vmatprep.subr.mxu0 0.0
    %523 = vmatpush2.msra.mxu0 0.0
    %524 = vmatprep.subr.mxu0 0.0
    %525 = vmatpush2.msra.mxu0 0.0
    %526 = vmatprep.subr.mxu0 0.0
    %527 = vmatpush2.msra.mxu0 0.0
    %528 = vmatprep.subr.mxu0 0.0
    %529 = vmatpush2.msra.mxu0 0.0
    %530 = vmatprep.subr.mxu0 0.0
    %531 = vmatpush2.msra.mxu0 0.0
    %532 = vmatprep.subr.mxu0 0.0
    %533 = vmatpush2.msra.mxu0 0.0
    %534 = vmatprep.subr.mxu0 0.0
    %535 = vmatpush2.msra.mxu0 0.0
    %536 = vmatprep.subr.mxu0 0.0
    %537 = vmatpush2.msra.mxu0 0.0
    %538 = vmatprep.subr.mxu0 0.0
    %539 = vmatpush2.msra.mxu0 0.0
    %540 = vmatprep.subr.mxu0 0.0
    %541 = vmatpush2.msra.mxu0 0.0
    %542 = vmatprep.subr.mxu0 0.0
    %543 = vmatpush2.msra.mxu0 0.0
    %544 = vmatprep.mubr.f32.mxu0 0.0
    %545 = vmatmul.mubr.f32.gmra.mxu0 %v154
    %v546 = vpop.f32.mrf.mxu0
    %v547 = vadd.f32 %v150, %v546
    %v548 = vpop.f32.mrf.mxu0
    %v549 = vadd.f32 %v150, %v548
    %550 = vdwg.mxu0
    %vm551 = vcmp.ge.f32.partialorder %v547, 0.0
    %vm552 = vcmp.ge.f32.partialorder %v549, 0.0
    %v553 = vmul.f32 %v547, 0.01
    %v554 = vmul.f32 %v549, 0.01
    %v555 = vsel %vm551, %v547, %v553
    %v556 = vsel %vm552, %v549, %v554
    %557 = vmatprep.subr.mxu0 0.0
    %558 = vmatpush1.msra.mxu0 0.0
    %559 = vmatprep.subr.mxu0 0.0
    %560 = vmatpush1.msra.mxu0 0.0
    %561 = vmatprep.subr.mxu0 0.0
    %562 = vmatpush1.msra.mxu0 0.0
    %563 = vmatprep.subr.mxu0 0.0
    %564 = vmatpush1.msra.mxu0 0.0
    %565 = vmatprep.subr.mxu0 0.0
    %566 = vmatpush1.msra.mxu0 0.0
    %567 = vmatprep.subr.mxu0 0.0
    %568 = vmatpush1.msra.mxu0 0.0
    %569 = vmatprep.subr.mxu0 0.0
    %570 = vmatpush1.msra.mxu0 0.0
    %571 = vmatprep.subr.mxu0 0.0
    %572 = vmatpush1.msra.mxu0 0.0
    %573 = vmatprep.subr.mxu0 0.0
    %574 = vmatpush1.msra.mxu0 0.0
    %575 = vmatprep.subr.mxu0 0.0
    %576 = vmatpush1.msra.mxu0 0.0
    %577 = vmatprep.subr.mxu0 0.0
    %578 = vmatpush1.msra.mxu0 0.0
    %579 = vmatprep.subr.mxu0 0.0
    %580 = vmatpush1.msra.mxu0 0.0
    %581 = vmatprep.subr.mxu0 0.0
    %582 = vmatpush1.msra.mxu0 0.0
    %583 = vmatprep.subr.mxu0 0.0
    %584 = vmatpush1.msra.mxu0 0.0
    %585 = vmatprep.subr.mxu0 0.0
    %586 = vmatpush1.msra.mxu0 0.0
    %587 = vmatprep.subr.mxu0 %v556
    %588 = vmatpush1.msra.mxu0 %v555
    %589 = vmatprep.subr.mxu0 0.0
    %590 = vmatpush2.msra.mxu0 0.0
    %591 = vmatprep.subr.mxu0 0.0
    %592 = vmatpush2.msra.mxu0 0.0
    %593 = vmatprep.subr.mxu0 0.0
    %594 = vmatpush2.msra.mxu0 0.0
    %595 = vmatprep.subr.mxu0 0.0
    %596 = vmatpush2.msra.mxu0 0.0
    %597 = vmatprep.subr.mxu0 0.0
    %598 = vmatpush2.msra.mxu0 0.0
    %599 = vmatprep.subr.mxu0 0.0
    %600 = vmatpush2.msra.mxu0 0.0
    %601 = vmatprep.subr.mxu0 0.0
    %602 = vmatpush2.msra.mxu0 0.0
    %603 = vmatprep.subr.mxu0 0.0
    %604 = vmatpush2.msra.mxu0 0.0
    %605 = vmatprep.subr.mxu0 0.0
    %606 = vmatpush2.msra.mxu0 0.0
    %607 = vmatprep.subr.mxu0 0.0
    %608 = vmatpush2.msra.mxu0 0.0
    %609 = vmatprep.subr.mxu0 0.0
    %610 = vmatpush2.msra.mxu0 0.0
    %611 = vmatprep.subr.mxu0 0.0
    %612 = vmatpush2.msra.mxu0 0.0
    %613 = vmatprep.subr.mxu0 0.0
    %614 = vmatpush2.msra.mxu0 0.0
    %615 = vmatprep.subr.mxu0 0.0
    %616 = vmatpush2.msra.mxu0 0.0
    %617 = vmatprep.subr.mxu0 0.0
    %618 = vmatpush2.msra.mxu0 0.0
    %619 = vmatprep.subr.mxu0 0.0
    %620 = vmatpush2.msra.mxu0 0.0
    %621 = vmatprep.mubr.f32.mxu0 0.0
    %622 = vmatmul.mubr.f32.gmra.mxu0 %v254
    %v623 = vpop.f32.mrf.mxu0
    %v624 = vadd.f32 %v236, %v623
    %v625 = vpop.f32.mrf.mxu0
    %v626 = vadd.f32 %v236, %v625
    %627 = vmatprep.mubr.f32.mxu0 0.0
    %628 = vmatmul.mubr.f32.gmra.mxu0 %v257
    %v629 = vpop.f32.mrf.mxu0
    %v630 = vadd.f32 %v241, %v629
    %v631 = vpop.f32.mrf.mxu0
    %v632 = vadd.f32 %v241, %v631
    %633 = vmatprep.mubr.f32.mxu0 0.0
    %634 = vmatmul.mubr.f32.gmra.mxu0 %v260
    %v635 = vpop.f32.mrf.mxu0
    %v636 = vadd.f32 %v246, %v635
    %v637 = vpop.f32.mrf.mxu0
    %v638 = vadd.f32 %v246, %v637
    %639 = vmatprep.mubr.f32.mxu0 0.0
    %640 = vmatmul.mubr.f32.gmra.mxu0 %v263
    %v641 = vpop.f32.mrf.mxu0
    %v642 = vadd.f32 %v251, %v641
    %v643 = vpop.f32.mrf.mxu0
    %v644 = vadd.f32 %v251, %v643
    %645 = vdwg.mxu0
    %v646 = vadd.f32 %v624, %v395
    %v647 = vadd.f32 %v626, %v396
    %v648 = vadd.f32 %v630, %v397
    %v649 = vadd.f32 %v632, %v398
    %v650 = vadd.f32 %v636, %v399
    %v651 = vadd.f32 %v638, %v400
    %v652 = vadd.f32 %v642, %v401
    %v653 = vadd.f32 %v644, %v402
    %vm654 = vcmp.ge.f32.partialorder %v646, 0.0
    %vm655 = vcmp.ge.f32.partialorder %v647, 0.0
    %vm656 = vcmp.ge.f32.partialorder %v648, 0.0
    %vm657 = vcmp.ge.f32.partialorder %v649, 0.0
    %vm658 = vcmp.ge.f32.partialorder %v650, 0.0
    %vm659 = vcmp.ge.f32.partialorder %v651, 0.0
    %vm660 = vcmp.ge.f32.partialorder %v652, 0.0
    %vm661 = vcmp.ge.f32.partialorder %v653, 0.0
    %v662 = vmul.f32 %v646, 0.01
    %v663 = vmul.f32 %v647, 0.01
    %v664 = vmul.f32 %v648, 0.01
    %v665 = vmul.f32 %v649, 0.01
    %v666 = vmul.f32 %v650, 0.01
    %v667 = vmul.f32 %v651, 0.01
    %v668 = vmul.f32 %v652, 0.01
    %v669 = vmul.f32 %v653, 0.01
    %v670 = vsel %vm654, %v646, %v662
    %v671 = vsel %vm655, %v647, %v663
    %v672 = vsel %vm656, %v648, %v664
    %v673 = vsel %vm657, %v649, %v665
    %v674 = vsel %vm658, %v650, %v666
    %v675 = vsel %vm659, %v651, %v667
    %v676 = vsel %vm660, %v652, %v668
    %v677 = vsel %vm661, %v653, %v669
    %s678 = scalar_lea.vmem [#allocation5], 64
    %679 = vst [vmem:[%s678] sm:$0xff] %v670
    %680 = vst [vmem:[%s678 + $0x8] sm:$0xff] %v671
    %681 = vst [vmem:[%s678 + $0x10] sm:$0xff] %v672
    %682 = vst [vmem:[%s678 + $0x18] sm:$0xff] %v673
    %683 = vst [vmem:[%s678 + $0x20] sm:$0xff] %v674
    %684 = vst [vmem:[%s678 + $0x28] sm:$0xff] %v675
    %685 = vst [vmem:[%s678 + $0x30] sm:$0xff] %v676
    %686 = vst [vmem:[%s678 + $0x38] sm:$0xff] %v677
    // Predicated region
    $region34: #{tpu_custom_call.1} parent=1 // pred_check
      _
    $region35: #{tpu_custom_call.1} parent=1 // pred_check_branch
      %688 = sbr.rel (0) target = $region37
    $region36: #{tpu_custom_call.1} parent=1 // pred_region
      %s690 = ssub.s32 2048, 2048
      %691 = vsyncadd [#allocation4], %s690
      %s692 = sshll.u32 [#allocation5], 4
      %s693 = int_to_ptr.vmem [resolvable:$true] %s692
      %698 = dma.vmem_to_hbm [thread:$0]  %s693, 2048, %s7, [#allocation4], 256, 256, 16
    $region37: #{tpu_custom_call.1} parent=1 // pred_fallthru
      _
    // Predicated region
    $region38: #{tpu_custom_call.1} parent=1 // pred_check
      _
    $region39: #{tpu_custom_call.1} parent=1 // pred_check_branch
      %700 = sbr.rel (0) target = $region41
    $region40: #{tpu_custom_call.1} parent=1 // pred_region
      %701 = dma.done [#allocation4], 2048
    $region41: #{tpu_custom_call.1} parent=1 // pred_fallthru
      _
    %702 = vsyncpa [#allocation3], 1
    %703 = vsyncpa [#allocation4], 1

</llo_original>
